<compile_context>
chip_gen: v7x
topology: tpu7x:2x2x1
jax: 0.10.0
libtpu: 0.0.40
codegen_flags: <defaults>
</compile_context>

<pallas_src>
import functools

import numpy as np

import jax
import jax.numpy as jnp
from jax import lax
from jax.experimental import pallas as pl
from jax.experimental.pallas import tpu as pltpu


def _focal_kernel(x_ref, t_ref, out_ref, *, C, gamma, cm, use_cm,
                  tile_rows, acc_rows, rem, need_mask):
    """One (batch image i, row-tile j) grid step.

    x_ref   : (1, C, tile_rows, 128) logits block (native dtype; cast in-kernel)
    t_ref   : (1, tile_rows, 128)    int32 targets
    out_ref : (1, acc_rows, 128)     per-image partial-loss accumulator,
                                     resident across the j (row-tile) axis.
    """
    j = pl.program_id(1)

    @pl.when(j == 0)
    def _():
        out_ref[...] = jnp.zeros_like(out_ref)

    t = t_ref[0]                                       # (tile_rows, 128) int32

    # Pass 1: per-pixel max over classes -- C-1 dense VPU maxes.
    m = x_ref[0, 0].astype(jnp.float32)
    for c in range(1, C):
        m = jnp.maximum(m, x_ref[0, c].astype(jnp.float32))

    # Pass 2: sum of exponentials + one-hot gathers via where-selects
    # (no onehot astype / multiply).
    denom = None
    x_t = None
    cm_t = None
    for c in range(C):
        xc = x_ref[0, c].astype(jnp.float32)
        e = jnp.exp(xc - m)
        denom = e if denom is None else denom + e
        sel = t == c
        x_t = jnp.where(sel, xc, 0.0 if x_t is None else x_t)
        if use_cm:
            cm_t = jnp.where(sel, cm[c], 0.0 if cm_t is None else cm_t)

    # log-sum-exp form: no (C,T) divide, no log of an underflowed pt.
    logpt = x_t - m - jnp.log(denom)                   # (tile_rows, 128)
    pt = jnp.exp(logpt)
    if use_cm:
        pt = pt * cm_t
        logpt = logpt * cm_t

    g = float(gamma)
    if g.is_integer():
        focal = lax.integer_pow(1.0 - pt, int(g))      # multiply chain
    else:
        focal = (1.0 - pt) ** g
    # alpha is a constant scalar -> applied to the final scalar in the wrapper.
    loss = focal * (-logpt)                            # (tile_rows, 128)

    def _accum(v):
        if tile_rows == acc_rows:
            folded = v
        else:
            # Split of the sublane-tiled row axis at multiples of 8 -> cheap
            # fold of (tile_rows,128) into the small (8,128) accumulator.
            folded = jnp.sum(v.reshape(tile_rows // acc_rows, acc_rows, 128),
                             axis=0)
        out_ref[...] = out_ref[...] + folded[None]

    if not need_mask:
        _accum(loss)
    else:
        last = pl.num_programs(1) - 1

        @pl.when(j != last)
        def _():
            _accum(loss)

        @pl.when(j == last)
        def _():
            r = lax.broadcasted_iota(jnp.int32, (tile_rows, 128), 0)
            l = lax.broadcasted_iota(jnp.int32, (tile_rows, 128), 1)
            valid = (r * 128 + l) < rem
            _accum(jnp.where(valid, loss, 0.0))


def focal_loss(inputs, target, *, class_num, gamma=2, alpha=1, weight=None,
               size_average=True, ignore_index=-100, _tile_rows=None):
    """JAX/Pallas equivalent of FocalLoss.forward.

    inputs: (N, C) or (N, C, H, W) float;  target: (N,) or (N, H, W) int.
    """
    if inputs.shape[0] != target.shape[0]:
        raise ValueError("Expected input batch_size to match target batch_size.")
    if inputs.shape[2:] != target.shape[1:]:
        raise ValueError("Expected input feature_size to match target feature_size.")
    if inputs.ndim < 2:
        raise ValueError("Expected 2 or more dimensions")
    assert 0 < alpha <= 1

    if inputs.ndim > 2:
        n, c = inputs.shape[0], inputs.shape[1]
        hw = 1
        for d in inputs.shape[2:]:
            hw *= d
        x3 = inputs.reshape(n, c, hw)                  # free reshape
        t2 = target.reshape(n, hw)
    else:
        # 2-D (rows, C): pixels must land lane/sublane-dense -> one tiny transpose.
        rows_in, c = inputs.shape
        n, hw = 1, rows_in
        x3 = jnp.transpose(inputs, (1, 0)).reshape(1, c, hw)
        t2 = target.reshape(1, hw)
    assert c == class_num
    m_total = n * hw

    # int32 targets (no-op when already int32). If targets arrive int8/uint8
    # upstream they could be streamed narrow and cast in-kernel (TODO hook).
    t2 = t2.astype(jnp.int32)

    # Static per-class multiplier = weight * ignore_index mask.  These are
    # constructor-time constants in the PyTorch module, so bake them in.
    use_cm = (weight is not None) or (0 <= ignore_index < class_num)
    if weight is not None:
        w_host = np.asarray(jax.device_get(weight), dtype=np.float32).reshape(-1)
        assert w_host.shape[0] == class_num
    else:
        w_host = np.ones((class_num,), np.float32)
    w_host = w_host.copy()
    if 0 <= ignore_index < class_num:
        w_host[ignore_index] = 0.0
    cm = tuple(float(v) for v in w_host)

    # Pixel layout: HW -> (rows, 128) lanes.  A pad copy only when HW % 128 != 0.
    rows = pl.cdiv(hw, 128)
    hw_pad = rows * 128
    if hw_pad != hw:
        x3 = jnp.pad(x3, ((0, 0), (0, 0), (0, hw_pad - hw)))
        t2 = jnp.pad(t2, ((0, 0), (0, hw_pad - hw)))
    x4 = x3.reshape(n, c, rows, 128)                   # free (splits last dim)
    t3 = t2.reshape(n, rows, 128)

    # Row-tile size: ~4 MiB of logits per block, bounded by a 1 MiB f32 pixel
    # tile (keeps elementwise temporaries well inside VMEM on every generation).
    itemsize = x4.dtype.itemsize
    if rows >= 8:
        cap_logits = max(8, ((4 * 1024 * 1024) // (c * 128 * itemsize)) // 8 * 8)
        cap_pixels = 2048
        tile_rows = min(cap_logits, cap_pixels, (rows // 8) * 8)
        if _tile_rows is not None:
            tr = max(8, (int(_tile_rows) // 8) * 8)
            tile_rows = min(tr, (rows // 8) * 8, cap_pixels)
    else:
        tile_rows = rows                               # full-dim (partial) block
    acc_rows = 8 if tile_rows % 8 == 0 else tile_rows
    num_row_tiles = pl.cdiv(rows, tile_rows)
    need_mask = (num_row_tiles * tile_rows * 128) != hw
    rem = hw - (num_row_tiles - 1) * tile_rows * 128   # valid pixels, last block

    kernel = functools.partial(
        _focal_kernel, C=int(c), gamma=float(gamma), cm=cm, use_cm=bool(use_cm),
        tile_rows=int(tile_rows), acc_rows=int(acc_rows),
        rem=int(rem), need_mask=bool(need_mask))

    # VMEM budget: double-buffered IO + elementwise-temp allowance + margin.
    logits_blk = c * tile_rows * 128 * itemsize
    tgt_blk = tile_rows * 128 * 4
    out_blk = acc_rows * 128 * 4
    pixel_blk = tile_rows * 128 * 4
    vmem_need = 2 * (logits_blk + tgt_blk + out_blk) + 16 * pixel_blk + (8 << 20)
    vmem_limit = int(min(max(vmem_need, 32 << 20), 48 << 20))

    partial = pl.pallas_call(
        kernel,
        out_shape=jax.ShapeDtypeStruct((n, acc_rows, 128), jnp.float32),
        grid_spec=pltpu.PrefetchScalarGridSpec(
            num_scalar_prefetch=0,
            grid=(n, num_row_tiles),
            in_specs=[
                pl.BlockSpec((1, c, tile_rows, 128), lambda i, j: (i, 0, j, 0)),
                pl.BlockSpec((1, tile_rows, 128), lambda i, j: (i, j, 0)),
            ],
            out_specs=pl.BlockSpec((1, acc_rows, 128), lambda i, j: (i, 0, 0)),
        ),
        compiler_params=pltpu.CompilerParams(
            dimension_semantics=("parallel", "arbitrary"),
            vmem_limit_bytes=vmem_limit,
        ),
    )(x4, t3)

    total = jnp.sum(partial) * jnp.float32(alpha)      # tiny reduction in XLA
    if size_average:
        return total / jnp.float32(m_total)
    return total


def _focal_loss_ref(inputs, target, *, class_num, gamma=2, alpha=1,
                    weight=None, size_average=True, ignore_index=-100):
    """Pure-JAX reference mirroring the PyTorch forward."""
    if inputs.ndim > 2:
        n, c = inputs.shape[0], inputs.shape[1]
        x = jnp.transpose(inputs.reshape(n, c, -1), (0, 2, 1)).reshape(-1, c)
    else:
        x = inputs
        c = inputs.shape[1]
    t = target.reshape(-1).astype(jnp.int32)
    p = jax.nn.softmax(x.astype(jnp.float32), axis=1)
    pt = jnp.take_along_axis(p, t[:, None], axis=1)
    logpt = jnp.log(pt)
    if weight is not None:
        wt = jnp.asarray(weight, jnp.float32).reshape(-1)[t][:, None]
        pt = pt * wt
        logpt = logpt * wt
    if 0 <= ignore_index < class_num:
        ig = jnp.ones((class_num,), jnp.float32).at[ignore_index].set(0.0)
        igt = ig[t][:, None]
        pt = pt * igt
        logpt = logpt * igt
    g = float(gamma)
    if g.is_integer():
        focal = lax.integer_pow(1.0 - pt, int(g))
    else:
        focal = (1.0 - pt) ** g
    loss = float(alpha) * (-1.0) * focal * logpt
    return loss.mean() if size_average else loss.sum()


if __name__ == "__main__":
    key = jax.random.PRNGKey(0)
    k_x, k_t, k_x2, k_t2, k_x3, k_t3, k_x4, k_t4 = jax.random.split(key, 8)

    # 1) Default config (gamma=2, alpha=1, no weight, no ignore), NCHW input.
    N, C, H, W = 2, 4, 16, 16
    inputs = jax.random.normal(k_x, (N, C, H, W), dtype=jnp.float32)
    target = jax.random.randint(k_t, (N, H, W), 0, C, dtype=jnp.int32)
    out1 = jax.block_until_ready(focal_loss(inputs, target, class_num=C))
    ref1 = _focal_loss_ref(inputs, target, class_num=C)
    assert jnp.allclose(out1, ref1, rtol=1e-4, atol=1e-5), (out1, ref1)

    # 2) Class weights + ignore_index, sum reduction.
    weight = jnp.array([0.5, 1.0, 0.75, 0.25], jnp.float32)
    out2 = jax.block_until_ready(
        focal_loss(inputs, target, class_num=C, weight=weight,
                   ignore_index=2, size_average=False))
    ref2 = _focal_loss_ref(inputs, target, class_num=C, weight=weight,
                           ignore_index=2, size_average=False)
    assert jnp.allclose(out2, ref2, rtol=1e-4, atol=1e-4), (out2, ref2)

    # 3) 2-D (N, C) input path (tiny, lane-padded + masked).
    x2d = jax.random.normal(k_x2, (8, C), dtype=jnp.float32)
    t2d = jax.random.randint(k_t2, (8,), 0, C, dtype=jnp.int32)
    out3 = jax.block_until_ready(focal_loss(x2d, t2d, class_num=C))
    ref3 = _focal_loss_ref(x2d, t2d, class_num=C)
    assert jnp.allclose(out3, ref3, rtol=1e-4, atol=1e-5), (out3, ref3)

    # 4) Ragged lane tail: HW=320 (not a multiple of 128) -> pad + mask path.
    x4 = jax.random.normal(k_x3, (1, C, 16, 20), dtype=jnp.float32)
    t4 = jax.random.randint(k_t3, (1, 16, 20), 0, C, dtype=jnp.int32)
    out4 = jax.block_until_ready(focal_loss(x4, t4, class_num=C))
    ref4 = _focal_loss_ref(x4, t4, class_num=C)
    assert jnp.allclose(out4, ref4, rtol=1e-4, atol=1e-5), (out4, ref4)

    # 5) Multi-row-tile grid with ragged row tail + in-kernel (8,128) fold.
    x5 = jax.random.normal(k_x4, (1, C, 48, 48), dtype=jnp.float32)   # HW=2304
    t5 = jax.random.randint(k_t4, (1, 48, 48), 0, C, dtype=jnp.int32)
    out5 = jax.block_until_ready(focal_loss(x5, t5, class_num=C))
    ref5 = _focal_loss_ref(x5, t5, class_num=C)
    assert jnp.allclose(out5, ref5, rtol=1e-4, atol=1e-5), (out5, ref5)

    # 6) Forced small row tile -> 3 accumulation steps on the row-tile axis.
    out6 = jax.block_until_ready(focal_loss(x5, t5, class_num=C, _tile_rows=8))
    assert jnp.allclose(out6, ref5, rtol=1e-4, atol=1e-5), (out6, ref5)

    print("KERNEL_OK")
</pallas_src>

<mosaic_0001>
module attributes {stable_mosaic.version = 11 : i64} {
  func.func @_focal_kernel(%arg0: i32, %arg1: i32, %arg2: memref<1x4x2x128xf32, #tpu.memory_space<vmem>>, %arg3: memref<1x2x128xi32, #tpu.memory_space<vmem>>, %arg4: memref<1x2x128xf32, #tpu.memory_space<vmem>>) attributes {dimension_semantics = [#tpu.dimension_semantics<parallel>, #tpu.dimension_semantics<arbitrary>], iteration_bounds = array<i64: 2, 1>, scalar_prefetch = 0 : i64, scratch_operands = 0 : i64, tpu.core_type = #tpu.core_type<tc>, window_params = [{transform_indices = @transform_0, window_bounds = array<i64: 1, 4, 2, 128>}, {transform_indices = @transform_1, window_bounds = array<i64: 1, 2, 128>}, {transform_indices = @transform_2, window_bounds = array<i64: 1, 2, 128>}]} {
    %c0_i32 = arith.constant 0 : i32
    %0 = arith.cmpi eq, %arg1, %c0_i32 : i32
    %1 = arith.extui %0 : i1 to i32
    %c0_i32_0 = arith.constant 0 : i32
    %2 = arith.cmpi ne, %1, %c0_i32_0 : i32
    scf.if %2 {
      %cst_41 = arith.constant 0.000000e+00 : f32
      %62 = vector.broadcast %cst_41 : f32 to vector<1x2x128xf32>
      %c0_42 = arith.constant 0 : index
      %c0_43 = arith.constant 0 : index
      %c0_44 = arith.constant 0 : index
      %63 = vector.load %arg4[%c0_42, %c0_43, %c0_44] : memref<1x2x128xf32, #tpu.memory_space<vmem>>, vector<1x2x128xf32>
      tpu.vector_store %arg4[%c0_42, %c0_43, %c0_44], %62 {strides = array<i32>} : memref<1x2x128xf32, #tpu.memory_space<vmem>>, vector<1x2x128xf32>,
    } else {
    }
    %c0 = arith.constant 0 : index
    %c0_1 = arith.constant 0 : index
    %c0_2 = arith.constant 0 : index
    %3 = vector.load %arg3[%c0, %c0_1, %c0_2] : memref<1x2x128xi32, #tpu.memory_space<vmem>>, vector<1x2x128xi32>
    %4 = vector.shape_cast %3 : vector<1x2x128xi32> to vector<2x128xi32>
    %c0_3 = arith.constant 0 : index
    %c0_4 = arith.constant 0 : index
    %c0_5 = arith.constant 0 : index
    %c0_6 = arith.constant 0 : index
    %5 = vector.load %arg2[%c0_3, %c0_4, %c0_5, %c0_6] : memref<1x4x2x128xf32, #tpu.memory_space<vmem>>, vector<1x1x2x128xf32>
    %6 = vector.shape_cast %5 : vector<1x1x2x128xf32> to vector<2x128xf32>
    %c0_7 = arith.constant 0 : index
    %c1 = arith.constant 1 : index
    %c0_8 = arith.constant 0 : index
    %c0_9 = arith.constant 0 : index
    %7 = vector.load %arg2[%c0_7, %c1, %c0_8, %c0_9] : memref<1x4x2x128xf32, #tpu.memory_space<vmem>>, vector<1x1x2x128xf32>
    %8 = vector.shape_cast %7 : vector<1x1x2x128xf32> to vector<2x128xf32>
    %9 = arith.maximumf %6, %8 : vector<2x128xf32>
    %c0_10 = arith.constant 0 : index
    %c2 = arith.constant 2 : index
    %c0_11 = arith.constant 0 : index
    %c0_12 = arith.constant 0 : index
    %10 = vector.load %arg2[%c0_10, %c2, %c0_11, %c0_12] : memref<1x4x2x128xf32, #tpu.memory_space<vmem>>, vector<1x1x2x128xf32>
    %11 = vector.shape_cast %10 : vector<1x1x2x128xf32> to vector<2x128xf32>
    %12 = arith.maximumf %9, %11 : vector<2x128xf32>
    %c0_13 = arith.constant 0 : index
    %c3 = arith.constant 3 : index
    %c0_14 = arith.constant 0 : index
    %c0_15 = arith.constant 0 : index
    %13 = vector.load %arg2[%c0_13, %c3, %c0_14, %c0_15] : memref<1x4x2x128xf32, #tpu.memory_space<vmem>>, vector<1x1x2x128xf32>
    %14 = vector.shape_cast %13 : vector<1x1x2x128xf32> to vector<2x128xf32>
    %15 = arith.maximumf %12, %14 : vector<2x128xf32>
    %c0_16 = arith.constant 0 : index
    %c0_17 = arith.constant 0 : index
    %c0_18 = arith.constant 0 : index
    %c0_19 = arith.constant 0 : index
    %16 = vector.load %arg2[%c0_16, %c0_17, %c0_18, %c0_19] : memref<1x4x2x128xf32, #tpu.memory_space<vmem>>, vector<1x1x2x128xf32>
    %17 = vector.shape_cast %16 : vector<1x1x2x128xf32> to vector<2x128xf32>
    %18 = arith.subf %17, %15 : vector<2x128xf32>
    %19 = math.exp %18 : vector<2x128xf32>
    %c0_i32_20 = arith.constant 0 : i32
    %20 = vector.broadcast %c0_i32_20 : i32 to vector<2x128xi32>
    %21 = arith.cmpi eq, %4, %20 : vector<2x128xi32>
    %cst = arith.constant 0.000000e+00 : f32
    %22 = vector.broadcast %cst : f32 to vector<2x128xf32>
    %23 = arith.select %21, %17, %22 : vector<2x128xi1>, vector<2x128xf32>
    %c0_21 = arith.constant 0 : index
    %c1_22 = arith.constant 1 : index
    %c0_23 = arith.constant 0 : index
    %c0_24 = arith.constant 0 : index
    %24 = vector.load %arg2[%c0_21, %c1_22, %c0_23, %c0_24] : memref<1x4x2x128xf32, #tpu.memory_space<vmem>>, vector<1x1x2x128xf32>
    %25 = vector.shape_cast %24 : vector<1x1x2x128xf32> to vector<2x128xf32>
    %26 = arith.subf %25, %15 : vector<2x128xf32>
    %27 = math.exp %26 : vector<2x128xf32>
    %28 = arith.addf %19, %27 : vector<2x128xf32>
    %c1_i32 = arith.constant 1 : i32
    %29 = vector.broadcast %c1_i32 : i32 to vector<2x128xi32>
    %30 = arith.cmpi eq, %4, %29 : vector<2x128xi32>
    %31 = arith.select %30, %25, %23 : vector<2x128xi1>, vector<2x128xf32>
    %c0_25 = arith.constant 0 : index
    %c2_26 = arith.constant 2 : index
    %c0_27 = arith.constant 0 : index
    %c0_28 = arith.constant 0 : index
    %32 = vector.load %arg2[%c0_25, %c2_26, %c0_27, %c0_28] : memref<1x4x2x128xf32, #tpu.memory_space<vmem>>, vector<1x1x2x128xf32>
    %33 = vector.shape_cast %32 : vector<1x1x2x128xf32> to vector<2x128xf32>
    %34 = arith.subf %33, %15 : vector<2x128xf32>
    %35 = math.exp %34 : vector<2x128xf32>
    %36 = arith.addf %28, %35 : vector<2x128xf32>
    %c2_i32 = arith.constant 2 : i32
    %37 = vector.broadcast %c2_i32 : i32 to vector<2x128xi32>
    %38 = arith.cmpi eq, %4, %37 : vector<2x128xi32>
    %39 = arith.select %38, %33, %31 : vector<2x128xi1>, vector<2x128xf32>
    %c0_29 = arith.constant 0 : index
    %c3_30 = arith.constant 3 : index
    %c0_31 = arith.constant 0 : index
    %c0_32 = arith.constant 0 : index
    %40 = vector.load %arg2[%c0_29, %c3_30, %c0_31, %c0_32] : memref<1x4x2x128xf32, #tpu.memory_space<vmem>>, vector<1x1x2x128xf32>
    %41 = vector.shape_cast %40 : vector<1x1x2x128xf32> to vector<2x128xf32>
    %42 = arith.subf %41, %15 : vector<2x128xf32>
    %43 = math.exp %42 : vector<2x128xf32>
    %44 = arith.addf %36, %43 : vector<2x128xf32>
    %c3_i32 = arith.constant 3 : i32
    %45 = vector.broadcast %c3_i32 : i32 to vector<2x128xi32>
    %46 = arith.cmpi eq, %4, %45 : vector<2x128xi32>
    %47 = arith.select %46, %41, %39 : vector<2x128xi1>, vector<2x128xf32>
    %48 = arith.subf %47, %15 : vector<2x128xf32>
    %49 = math.log %44 : vector<2x128xf32>
    %50 = arith.subf %48, %49 : vector<2x128xf32>
    %51 = math.exp %50 : vector<2x128xf32>
    %cst_33 = arith.constant 1.000000e+00 : f32
    %52 = vector.broadcast %cst_33 : f32 to vector<2x128xf32>
    %53 = arith.subf %52, %51 : vector<2x128xf32>
    %54 = arith.mulf %53, %53 : vector<2x128xf32>
    %cst_34 = arith.constant 0.000000e+00 : f32
    %55 = vector.broadcast %cst_34 : f32 to vector<2x128xf32>
    %56 = arith.subf %55, %50 : vector<2x128xf32>
    %57 = arith.mulf %54, %56 : vector<2x128xf32>
    %c0_35 = arith.constant 0 : index
    %c0_36 = arith.constant 0 : index
    %c0_37 = arith.constant 0 : index
    %58 = vector.load %arg4[%c0_35, %c0_36, %c0_37] : memref<1x2x128xf32, #tpu.memory_space<vmem>>, vector<1x2x128xf32>
    %59 = vector.shape_cast %57 : vector<2x128xf32> to vector<1x2x128xf32>
    %60 = arith.addf %58, %59 : vector<1x2x128xf32>
    %c0_38 = arith.constant 0 : index
    %c0_39 = arith.constant 0 : index
    %c0_40 = arith.constant 0 : index
    %61 = vector.load %arg4[%c0_38, %c0_39, %c0_40] : memref<1x2x128xf32, #tpu.memory_space<vmem>>, vector<1x2x128xf32>
    tpu.vector_store %arg4[%c0_38, %c0_39, %c0_40], %60 {strides = array<i32>} : memref<1x2x128xf32, #tpu.memory_space<vmem>>, vector<1x2x128xf32>,
    return
  }
  func.func @transform_0(%arg0: i32, %arg1: i32) -> (i32, i32, i32, i32) {
    %c0_i32 = arith.constant 0 : i32
    %c0_i32_0 = arith.constant 0 : i32
    %c0_i32_1 = arith.constant 0 : i32
    return %arg0, %c0_i32, %arg1, %c0_i32_0 : i32, i32, i32, i32
  }
  func.func @transform_1(%arg0: i32, %arg1: i32) -> (i32, i32, i32) {
    %c0_i32 = arith.constant 0 : i32
    %c0_i32_0 = arith.constant 0 : i32
    return %arg0, %arg1, %c0_i32 : i32, i32, i32
  }
  func.func @transform_2(%arg0: i32, %arg1: i32) -> (i32, i32, i32) {
    %c0_i32 = arith.constant 0 : i32
    %c0_i32_0 = arith.constant 0 : i32
    %c0_i32_1 = arith.constant 0 : i32
    return %arg0, %c0_i32, %c0_i32_0 : i32, i32, i32
  }
}

</mosaic_0001>

<llo_original>
// kernel: tpu_custom_call.1
$region0: #{tpu_custom_call.1}
  #allocation0 [shape = 'u32[]', space=smem, size = 0x4, offset = 0x4, fixed_abs, tag = 'smem constant byte address 0x4 - core index']
  #allocation1 [shape = 'u32[144,128]{1,0:T(1,128)}', space=vmem, size = 0x12000, scoped, tag = 'internal scratch']
  %s0 = inlined_call_operand.hbm [shape: f32[2,4,2,128], index: 0, kind: input, shape index: {}]
  %s1 = inlined_call_operand.hbm [shape: s32[2,2,128], index: 1, kind: input, shape index: {}]
  %s2 = inlined_call_operand.hbm [shape: f32[2,2,128], index: 2, kind: output, shape index: {}]
  %s3 = sld [smem:[#allocation0]]
  $region53: #{tpu_custom_call.1} parent=0
    _
  %s5 = ssub.s32 1, %s3
  %s6 = scalar_select 0, %s5, %s3
  $region1: #{tpu_custom_call.1} parent=0
    #allocation2 [shape = 'u8[8192]{0}', space=vmem, size = 0x2000, scoped, tag = 'input window, operand 0']
    #allocation3 [shape = 's32[2]{0}', space=sflag, size = 0x8, scoped, tag = 'scoped memory for tpu_custom_call.1']
    #allocation4 [shape = 's32[2]{0}', space=sflag, size = 0x8, scoped, tag = 'scoped memory for tpu_custom_call.1']
    #allocation5 [shape = 'u8[2048]{0}', space=vmem, size = 0x800, scoped, tag = 'input window, operand 1']
    #allocation6 [shape = 's32[2]{0}', space=sflag, size = 0x8, scoped, tag = 'scoped memory for tpu_custom_call.1']
    #allocation7 [shape = 'u8[2048]{0}', space=vmem, size = 0x800, scoped, tag = 'output window, operand 0']
    %7 = vsyncpa [#allocation3], 0
    %s8 = scalar_lea.sflag [#allocation3], 1
    %9 = vsyncpa %s8, 0
    %10 = vsyncpa [#allocation6], 0
    %s11 = scalar_lea.sflag [#allocation6], 1
    %12 = vsyncpa %s11, 0
    %13 = vsyncpa [#allocation4], 0
    %s14 = scalar_lea.sflag [#allocation4], 1
    %15 = vsyncpa %s14, 0
    loop: start=0, step=1, limit=4
    $region2: #{tpu_custom_call.1} parent=1 // loop_pre_header
      _
    $region3: #{tpu_custom_call.1} parent=1 // loop_header
      %s17 = sphi 0, %s21
      %p18 = scmp.ge.s32.totalorder %s17, 4
      %s24 = sphi 0, %s36
      %s25 = sphi 0, %s32
      %s26 = sphi 0, %s24
      %s27 = sphi 0, %s25
      %s28 = sphi 0, %s26
      %s29 = sphi 0, %s27
      %s41 = sphi 0, %s43
      %s44 = sphi 0, %s41
      %s45 = sphi 0, %s44
      %s61 = sphi 0, %s45
      %s69 = sphi 0, %s71
      %s72 = sphi 0, %s69
      %s73 = sphi 0, %s72
      %s89 = sphi 0, %s73
      %s95 = sphi 0, %s97
      %s98 = sphi 0, %s95
      %s99 = sphi 0, %s98
      %s115 = sphi 0, %s99
    $region4: #{tpu_custom_call.1} parent=1 // loop_header_branch
      %20 = sbr.rel (%p18) target = $region8
    $region5: #{tpu_custom_call.1} parent=1 // loop_body
      %s22 = ssub.s32 %s17, 1
      %s23 = ssub.s32 %s17, 2
      %s30 = sadd.s32 1, %s25
      %p31 = scmp.ge.s32.totalorder %s30, 1
      %s32 = scalar_select %p31, 0, %s30
      %s33 = sadd.s32 1, %s24
      %s34 = scalar_select %p31, %s33, %s24
      %p35 = scmp.ge.s32.totalorder %s34, 2
      %s36 = scalar_select %p35, 0, %s34
      %s37 = ssub.s32 %s24, %s36
      %s38 = ssub.s32 %s25, %s32
      %s39 = sor.u32 %s37, %s38
      %p40 = scmp.eq.s32.totalorder %s39, 0
      %s42 = sadd.s32 %s41, 1
      %s43 = scalar_select %p40, %s41, %s42
      %p46 = pneg %p40
      %p47 = scmp.eq.s32.totalorder %s17, 1
      %p48 = por %p46, %p47
      %p49 = scmp.ne.s32.totalorder %s41, %s44
      %p50 = scmp.eq.s32.totalorder %s17, 0
      %p51 = por %p49, %p50
      %p52 = scmp.ne.s32.totalorder %s41, %s44
      %p53 = scmp.eq.s32.totalorder %s22, 1
      %p54 = por %p52, %p53
      %p55 = scmp.ne.s32.totalorder %s44, %s45
      %p56 = scmp.eq.s32.totalorder %s22, 0
      %p57 = por %p55, %p56
      %p58 = scmp.ne.s32.totalorder %s44, %s45
      %p59 = scmp.eq.s32.totalorder %s23, 1
      %p60 = por %p58, %p59
      %p62 = scmp.ne.s32.totalorder %s45, %s61
      %p63 = scmp.eq.s32.totalorder %s23, 0
      %p64 = por %p62, %p63
      %s65 = ssub.s32 %s24, %s36
      %s66 = ssub.s32 %s25, %s32
      %s67 = sor.u32 %s65, %s66
      %p68 = scmp.eq.s32.totalorder %s67, 0
      %s70 = sadd.s32 %s69, 1
      %s71 = scalar_select %p68, %s69, %s70
      %p74 = pneg %p68
      %p75 = scmp.eq.s32.totalorder %s17, 1
      %p76 = por %p74, %p75
      %p77 = scmp.ne.s32.totalorder %s69, %s72
      %p78 = scmp.eq.s32.totalorder %s17, 0
      %p79 = por %p77, %p78
      %p80 = scmp.ne.s32.totalorder %s69, %s72
      %p81 = scmp.eq.s32.totalorder %s22, 1
      %p82 = por %p80, %p81
      %p83 = scmp.ne.s32.totalorder %s72, %s73
      %p84 = scmp.eq.s32.totalorder %s22, 0
      %p85 = por %p83, %p84
      %p86 = scmp.ne.s32.totalorder %s72, %s73
      %p87 = scmp.eq.s32.totalorder %s23, 1
      %p88 = por %p86, %p87
      %p90 = scmp.ne.s32.totalorder %s73, %s89
      %p91 = scmp.eq.s32.totalorder %s23, 0
      %p92 = por %p90, %p91
      %s93 = ssub.s32 %s24, %s36
      %p94 = scmp.eq.s32.totalorder %s93, 0
      %s96 = sadd.s32 %s95, 1
      %s97 = scalar_select %p94, %s95, %s96
      %p100 = pneg %p94
      %p101 = scmp.eq.s32.totalorder %s17, 1
      %p102 = por %p100, %p101
      %p103 = scmp.ne.s32.totalorder %s95, %s98
      %p104 = scmp.eq.s32.totalorder %s17, 0
      %p105 = por %p103, %p104
      %p106 = scmp.ne.s32.totalorder %s95, %s98
      %p107 = scmp.eq.s32.totalorder %s22, 1
      %p108 = por %p106, %p107
      %p109 = scmp.ne.s32.totalorder %s98, %s99
      %p110 = scmp.eq.s32.totalorder %s22, 0
      %p111 = por %p109, %p110
      %p112 = scmp.ne.s32.totalorder %s98, %s99
      %p113 = scmp.eq.s32.totalorder %s23, 1
      %p114 = por %p112, %p113
      %p116 = scmp.ne.s32.totalorder %s99, %s115
      %p117 = scmp.eq.s32.totalorder %s23, 0
      %p118 = por %p116, %p117
      %p119 = scmp.le.s32.totalorder 1, %s17
      %p120 = scmp.lt.s32.totalorder %s17, 3
      %p121 = pnand %p119, %p120
      %p122 = pneg %p121
      // Predicated region
      $region9: #{tpu_custom_call.1} parent=5 // pred_check
        _
      $region10: #{tpu_custom_call.1} parent=5 // pred_check_branch
        %124 = sbr.rel (%p121) target = $region12
      $region11: #{tpu_custom_call.1} parent=5 // pred_region
        %s125 = ssub.s32 %s17, 1
      $region12: #{tpu_custom_call.1} parent=5 // pred_fallthru
        _
      %p126 = scmp.lt.s32.totalorder %s17, 2
      // Predicated region
      $region13: #{tpu_custom_call.1} parent=5 // pred_check
        %p127 = pneg %p126
      $region14: #{tpu_custom_call.1} parent=5 // pred_check_branch
        %129 = sbr.rel (%p127) target = $region16
      $region15: #{tpu_custom_call.1} parent=5 // pred_region
        // Predicated region
        $region17: #{tpu_custom_call.1} parent=15 // pred_check
          %p130 = pneg %p51
        $region18: #{tpu_custom_call.1} parent=15 // pred_check_branch
          %132 = sbr.rel (%p130) target = $region20
        $region19: #{tpu_custom_call.1} parent=15 // pred_region
          %s133 = sand.u32 %s41, 1
          %s134 = scalar_lea.sflag [#allocation3], %s133
          %s135 = sand.u32 %s41, 1
          %s136 = smul.addr %s135, 8
          %s137 = scalar_lea.vmem [#allocation2], %s136
          %s139 = ssub.s32 128, 128
          %140 = vsyncadd %s134, %s139
          %s141 = smul.addr %s24, 4
          %s142 = sadd.s32 %s25, %s141
          %s143 = smul.addr %s142, 32
          %s144 = scalar_lea.hbm %s0, %s143
          %s145 = sshll.u32 %s137, 4
          %s146 = int_to_ptr.vmem [resolvable:$true] %s145
          %151 = dma.hbm_to_vmem [thread:$0]  %s144, 128, %s146, %s134, 32, 32, 2
        $region20: #{tpu_custom_call.1} parent=15 // pred_fallthru
          _
        // Predicated region
        $region21: #{tpu_custom_call.1} parent=15 // pred_check
          %p152 = pneg %p79
        $region22: #{tpu_custom_call.1} parent=15 // pred_check_branch
          %154 = sbr.rel (%p152) target = $region24
        $region23: #{tpu_custom_call.1} parent=15 // pred_region
          %s155 = sand.u32 %s69, 1
          %s156 = scalar_lea.sflag [#allocation6], %s155
          %s157 = sand.u32 %s69, 1
          %s158 = smul.addr %s157, 2
          %s159 = scalar_lea.vmem [#allocation5], %s158
          %s161 = ssub.s32 32, 32
          %162 = vsyncadd %s156, %s161
          %s163 = sadd.s32 %s25, %s24
          %s164 = smul.addr %s163, 32
          %s165 = scalar_lea.hbm %s1, %s164
          %s167 = sshll.u32 %s159, 4
          %s168 = int_to_ptr.vmem [resolvable:$true] %s167
          %170 = dma.hbm_to_vmem [thread:$0]  %s165, 32, %s168, %s156
        $region24: #{tpu_custom_call.1} parent=15 // pred_fallthru
          _
      $region16: #{tpu_custom_call.1} parent=5 // pred_fallthru
        _
      %p171 = scmp.le.s32.totalorder 1, %s17
      %p172 = scmp.lt.s32.totalorder %s17, 3
      %p173 = pnand %p171, %p172
      %p174 = pneg %p173
      // Predicated region
      $region25: #{tpu_custom_call.1} parent=5 // pred_check
        _
      $region26: #{tpu_custom_call.1} parent=5 // pred_check_branch
        %176 = sbr.rel (%p173) target = $region28
      $region27: #{tpu_custom_call.1} parent=5 // pred_region
        %s177 = ssub.s32 %s17, 1
        %s178 = sand.u32 %s44, 1
        %s179 = scalar_lea.sflag [#allocation3], %s178
        %s180 = sand.u32 %s44, 1
        %s181 = smul.addr %s180, 8
        %s182 = scalar_lea.vmem [#allocation2], %s181
        // Predicated region
        $region29: #{tpu_custom_call.1} parent=27 // pred_check
          %p183 = pneg %p57
        $region30: #{tpu_custom_call.1} parent=27 // pred_check_branch
          %185 = sbr.rel (%p183) target = $region32
        $region31: #{tpu_custom_call.1} parent=27 // pred_region
          %186 = dma.done %s179, 128
        $region32: #{tpu_custom_call.1} parent=27 // pred_fallthru
          _
        %s187 = sand.u32 %s72, 1
        %s188 = scalar_lea.sflag [#allocation6], %s187
        %s189 = sand.u32 %s72, 1
        %s190 = smul.addr %s189, 2
        %s191 = scalar_lea.vmem [#allocation5], %s190
        // Predicated region
        $region33: #{tpu_custom_call.1} parent=27 // pred_check
          %p192 = pneg %p85
        $region34: #{tpu_custom_call.1} parent=27 // pred_check_branch
          %194 = sbr.rel (%p192) target = $region36
        $region35: #{tpu_custom_call.1} parent=27 // pred_region
          %195 = dma.done %s188, 32
        $region36: #{tpu_custom_call.1} parent=27 // pred_fallthru
          _
        %s196 = sand.u32 %s44, 1
        %s197 = scalar_lea.sflag [#allocation3], %s196
        %s198 = sand.u32 %s44, 1
        %s199 = smul.addr %s198, 8
        %s200 = scalar_lea.vmem [#allocation2], %s199
        %p201 = pneg %p57
        %p202 = pneg %p54
        %s203 = sand.u32 %s72, 1
        %s204 = scalar_lea.sflag [#allocation6], %s203
        %s205 = sand.u32 %s72, 1
        %s206 = smul.addr %s205, 2
        %s207 = scalar_lea.vmem [#allocation5], %s206
        %p208 = pneg %p85
        %p209 = pneg %p82
        %p210 = pneg %p111
        %p211 = pneg %p108
        %s212 = sand.u32 %s98, 1
        %s213 = scalar_lea.sflag [#allocation4], %s212
        %s214 = sand.u32 %s98, 1
        %s215 = smul.addr %s214, 2
        %s216 = scalar_lea.vmem [#allocation7], %s215
        %p217 = scmp.eq.s32.totalorder %s27, 0
        // Predicated region
        $region37: #{tpu_custom_call.1} parent=27 // pred_check
          %p218 = pneg %p217
        $region38: #{tpu_custom_call.1} parent=27 // pred_check_branch
          %220 = sbr.rel (%p218) target = $region40
        $region39: #{tpu_custom_call.1} parent=27 // pred_region
          %221 = vst [vmem:[%s216] sm:$0x3] 0.0
        $region40: #{tpu_custom_call.1} parent=27 // pred_fallthru
          _
        %v222 = vld [vmem:[%s191] sm:$0x3]
        %v223 = vld [vmem:[%s182] sm:$0x3]
        %s224 = scalar_lea.vmem %s182, 2 [#allocation2]
        %v225 = vld [vmem:[%s224] sm:$0x3]
        %v226 = vmax.f32 %v223, %v225
        %s227 = scalar_lea.vmem %s182, 4 [#allocation2]
        %v228 = vld [vmem:[%s227] sm:$0x3]
        %v229 = vmax.f32 %v226, %v228
        %s230 = scalar_lea.vmem %s182, 6 [#allocation2]
        %v231 = vld [vmem:[%s230] sm:$0x3]
        %v232 = vmax.f32 %v229, %v231
        %v233 = vsub.f32 %v223, %v232
        %v234 = vmul.f32 %v233, 1.442695
        %v235 = vpow.pop %v234
        %vm236 = vcmp.eq.s32.totalorder %v222, 0
        %v237 = vsel %vm236, %v223, 0.0
        %v238 = vsub.f32 %v225, %v232
        %v239 = vmul.f32 %v238, 1.442695
        %v240 = vpow.pop %v239
        %v241 = vadd.f32 %v235, %v240
        %vm242 = vcmp.eq.s32.totalorder %v222, 1
        %v243 = vsel %vm242, %v225, %v237
        %v244 = vsub.f32 %v228, %v232
        %v245 = vmul.f32 %v244, 1.442695
        %v246 = vpow.pop %v245
        %v247 = vadd.f32 %v241, %v246
        %vm248 = vcmp.eq.s32.totalorder %v222, 2
        %v249 = vsel %vm248, %v228, %v243
        %v250 = vsub.f32 %v231, %v232
        %v251 = vmul.f32 %v250, 1.442695
        %v252 = vpow.pop %v251
        %v253 = vadd.f32 %v247, %v252
        %vm254 = vcmp.eq.s32.totalorder %v222, 3
        %v255 = vsel %vm254, %v231, %v249
        %v256 = vsub.f32 %v255, %v232
        %v257 = vlog2.pop %v253
        %v258 = vmul.f32 %v257, 0.6931472
        %v259 = vsub.f32 %v256, %v258
        %v260 = vmul.f32 %v259, 1.442695
        %v261 = vpow.pop %v260
        %v262 = vsub.f32 1.0, %v261
        %v263 = vmul.f32 %v262, %v262
        %v264 = vsub.f32 0.0, %v259
        %v265 = vmul.f32 %v263, %v264
        %v266 = vld [vmem:[%s216] sm:$0x3]
        %v267 = vadd.f32 %v266, %v265
        %268 = vst [vmem:[%s216] sm:$0x3] %v267
        %s269 = sand.u32 %s98, 1
        %s270 = scalar_lea.sflag [#allocation4], %s269
        %s271 = sand.u32 %s98, 1
        %s272 = smul.addr %s271, 2
        %s273 = scalar_lea.vmem [#allocation7], %s272
        // Predicated region
        $region41: #{tpu_custom_call.1} parent=27 // pred_check
          %p274 = pneg %p108
        $region42: #{tpu_custom_call.1} parent=27 // pred_check_branch
          %276 = sbr.rel (%p274) target = $region44
        $region43: #{tpu_custom_call.1} parent=27 // pred_region
          %s278 = ssub.s32 32, 32
          %279 = vsyncadd %s270, %s278
          %s280 = smul.addr %s26, 32
          %s281 = scalar_lea.hbm %s2, %s280
          %s283 = sshll.u32 %s273, 4
          %s284 = int_to_ptr.vmem [resolvable:$true] %s283
          %286 = dma.vmem_to_hbm [thread:$0]  %s284, 32, %s281, %s270
        $region44: #{tpu_custom_call.1} parent=27 // pred_fallthru
          _
      $region28: #{tpu_custom_call.1} parent=5 // pred_fallthru
        _
      %p287 = scmp.le.s32.totalorder 2, %s17
      // Predicated region
      $region45: #{tpu_custom_call.1} parent=5 // pred_check
        %p288 = pneg %p287
      $region46: #{tpu_custom_call.1} parent=5 // pred_check_branch
        %290 = sbr.rel (%p288) target = $region48
      $region47: #{tpu_custom_call.1} parent=5 // pred_region
        %s291 = ssub.s32 %s17, 2
        // Predicated region
        $region49: #{tpu_custom_call.1} parent=47 // pred_check
          %p292 = pneg %p114
        $region50: #{tpu_custom_call.1} parent=47 // pred_check_branch
          %294 = sbr.rel (%p292) target = $region52
        $region51: #{tpu_custom_call.1} parent=47 // pred_region
          %s295 = sand.u32 %s99, 1
          %s296 = scalar_lea.sflag [#allocation4], %s295
          %s297 = sand.u32 %s99, 1
          %s298 = smul.addr %s297, 2
          %s299 = scalar_lea.vmem [#allocation7], %s298
          %300 = dma.done %s296, 32
        $region52: #{tpu_custom_call.1} parent=47 // pred_fallthru
          _
      $region48: #{tpu_custom_call.1} parent=5 // pred_fallthru
        _
    $region6: #{tpu_custom_call.1} parent=1 // loop_footer
      %s21 = sadd.s32 1, %s17
    $region7: #{tpu_custom_call.1} parent=1 // loop_footer_branch
      %16 = sbr.rel target = $region3
    $region8: #{tpu_custom_call.1} parent=1 // loop_exit
      _
    %301 = vsyncpa [#allocation3], 1
    %s302 = scalar_lea.sflag [#allocation3], 1
    %303 = vsyncpa %s302, 1
    %304 = vsyncpa [#allocation6], 1
    %s305 = scalar_lea.sflag [#allocation6], 1
    %306 = vsyncpa %s305, 1
    %307 = vsyncpa [#allocation4], 1
    %s308 = scalar_lea.sflag [#allocation4], 1
    %309 = vsyncpa %s308, 1

</llo_original>
